<compile_context>
chip_gen: v7x
topology: tpu7x:2x2x1
jax: 0.10.0
libtpu: 0.0.40
codegen_flags: <defaults>
</compile_context>

<pallas_src>
import functools

import jax
import jax.numpy as jnp
import numpy as np
from jax import lax
from jax.experimental import pallas as pl
from jax.experimental.pallas import tpu as pltpu

_TI = 128   # i (row / reduction) tile, sublane dim
_TJ = 128   # j (column / output) tile, lane dim


def _round_up(x, m):
    return ((x + m - 1) // m) * m


def _smooth_ap_kernel(q_ref, db_ref, out_ref, acc_all_ref, acc_pos_ref, *,
                      n_valid, pos_len, inv_four_anneal, ti):
    """One j-block of columns: accumulate tanh column sums over all i-blocks."""
    tj = out_ref.shape[1]
    j = pl.program_id(0)
    j_start = pl.multiple_of(j * tj, tj)

    q = q_ref[...]                                               # (1, bit)

    # Row of scaled dot products for this block of columns: (1, TJ).
    db_j = db_ref[pl.ds(j_start, tj), :]                         # (TJ, bit)
    b_row = lax.dot_general(q, db_j, (((1,), (1,)), ((), ())),
                            preferred_element_type=jnp.float32) * inv_four_anneal

    # Row accumulators persist across grid steps -> re-zero every step.
    acc_all_ref[...] = jnp.zeros_like(acc_all_ref)
    acc_pos_ref[...] = jnp.zeros_like(acc_pos_ref)

    def add_block(i_start, *, add_pos=False, mask_pos=False, mask_all=False):
        db_i = db_ref[pl.ds(i_start, ti), :]                     # (TI, bit)
        # Column-layout copy of the scaled dots via a second skinny MXU pass
        # -- avoids a cross-lane transpose of the (1, N) row; hidden under EUP.
        b_col = lax.dot_general(db_i, q, (((1,), (1,)), ((), ())),
                                preferred_element_type=jnp.float32) * inv_four_anneal
        tile = jnp.tanh(b_col - b_row)                           # (TI, TJ), EUP
        if mask_all or mask_pos:
            gi = i_start + lax.broadcasted_iota(jnp.int32, (ti, 1), 0)
        # Reduce the tile over i immediately -> only (1, TJ) hits VMEM.
        if mask_all:
            sum_all = jnp.sum(jnp.where(gi < n_valid, tile, 0.0),
                              axis=0, keepdims=True)
        else:
            sum_all = jnp.sum(tile, axis=0, keepdims=True)       # (1, TJ)
        acc_all_ref[...] += sum_all
        if add_pos:
            if mask_pos:
                sum_pos = jnp.sum(jnp.where(gi < pos_len, tile, 0.0),
                                  axis=0, keepdims=True)
            else:
                sum_pos = sum_all                                # full pos block: reuse
            acc_pos_ref[...] += sum_pos

    pos_full = pos_len // ti          # i-blocks fully inside [0, pos_len)
    all_full = n_valid // ti          # i-blocks fully inside [0, n_valid)
    pos_tail = (pos_len % ti) != 0
    all_tail = (n_valid % ti) != 0

    # 1) blocks fully below pos_len feed both accumulators, unmasked.
    if pos_full > 0:
        @pl.loop(0, pos_full)
        def _(ib):
            add_block(pl.multiple_of(ib * ti, ti), add_pos=True)

    # 2) the single block straddling pos_len (the only place a pos mask runs).
    if pos_tail:
        straddles_n = (pos_full + 1) * ti > n_valid
        add_block(pos_full * ti, add_pos=True, mask_pos=True, mask_all=straddles_n)

    # 3) remaining full blocks feed the all-rank accumulator only.
    start3 = pos_full + (1 if pos_tail else 0)
    if all_full > start3:
        @pl.loop(start3, all_full)
        def _(ib):
            add_block(pl.multiple_of(ib * ti, ti))

    # 4) the single block straddling n_valid (if not already handled in 2).
    if all_tail and all_full >= start3:
        add_block(all_full * ti, mask_all=True)

    # Finalize with the closed-form constants (diagonal sigmoid(0)=0.5 and the
    # "+1" fold into 0.5*n + 0.5; the diagonal tanh term is exactly zero).
    rank_all = 0.5 * acc_all_ref[...] + (0.5 * n_valid + 0.5)
    rank_pos = 0.5 * acc_pos_ref[...] + (0.5 * pos_len + 0.5)
    gj = j_start + lax.broadcasted_iota(jnp.int32, (1, tj), 1)
    out_ref[...] = jnp.where(gj < pos_len, rank_pos / rank_all, 0.0)


def smooth_ap(query, database, pos_len, anneal):
    """JAX/Pallas forward pass of SmoothAP.  query: (1, bit), database: (n, bit)."""
    query = jnp.asarray(query, jnp.float32)
    database = jnp.asarray(database, jnp.float32)
    if query.ndim != 2 or query.shape[0] != 1:
        raise ValueError("query must have shape (1, bit)")
    n, bit = database.shape
    p = min(int(pos_len), n)          # torch's database[:pos_len] clamps the same way

    ndb = _round_up(n, max(_TI, _TJ))
    db_p = database if ndb == n else jnp.pad(database, ((0, ndb - n), (0, 0)))
    pp = _round_up(p, _TJ)
    n_j = pp // _TJ

    kernel = functools.partial(
        _smooth_ap_kernel,
        n_valid=n,
        pos_len=p,
        inv_four_anneal=1.0 / (4.0 * float(anneal)),
        ti=_TI,
    )

    # db stays resident in VMEM (constant index map); budget for the pipeline
    # possibly double-buffering it, plus tiny scratch / output blocks.
    est_bytes = 2 * ndb * bit * 4 + 4 * _TJ * 8 + 4 * pp + 4 * bit + (1 << 20)
    cp_kwargs = dict(dimension_semantics=("parallel",))
    if est_bytes > 12 * 1024 * 1024:
        # TODO(synk): for databases past ~40 MiB, stream db per i-block via a
        # second ("arbitrary") grid axis instead of keeping it resident
        # (required on v7x's 64 MiB VMEM).
        cp_kwargs["vmem_limit_bytes"] = int(min(est_bytes, 48 << 20))

    ratios = pl.pallas_call(
        kernel,
        out_shape=jax.ShapeDtypeStruct((1, pp), jnp.float32),
        grid=(n_j,),
        in_specs=[
            pl.BlockSpec((1, bit), lambda j: (0, 0)),
            pl.BlockSpec((ndb, bit), lambda j: (0, 0)),
        ],
        out_specs=pl.BlockSpec((1, _TJ), lambda j: (0, j)),
        scratch_shapes=[
            pltpu.VMEM((1, _TJ), jnp.float32),   # acc_all row
            pltpu.VMEM((1, _TJ), jnp.float32),   # acc_pos row
        ],
        compiler_params=pltpu.CompilerParams(**cp_kwargs),
    )(query, db_p)

    ap = jnp.sum(ratios) / float(p)   # tiny O(P) reduction in XLA
    return 1.0 - ap


def _reference_smooth_ap(query, database, pos_len, anneal):
    """Pure-numpy transcription of the PyTorch module (for verification)."""
    q = np.asarray(query, np.float32)
    db = np.asarray(database, np.float32)

    def rank(y):
        k = q.shape[0]                     # len(query) == 1
        s = (k - q @ y.T) / 2.0            # (1, n)
        n = y.shape[0]
        d = s - s.T                        # (n, n), d[i,j] = s_j - s_i
        expo = np.clip(-d / anneal, -50.0, 50.0)
        sg = (1.0 / (1.0 + np.exp(expo))) * (1.0 - np.eye(n, dtype=np.float32))
        return sg.sum(axis=0) + 1.0        # (n,)

    all_rk = rank(db)
    pos_rk = rank(db[:pos_len])
    ap = np.sum(pos_rk / all_rk[:pos_len]) / pos_len
    return 1.0 - ap


if __name__ == "__main__":
    BIT, BATCH, POS_LEN = 32, 8, 4
    ANNEAL = 0.1

    key = jax.random.PRNGKey(0)
    kq, kd = jax.random.split(key)
    # Binary (+/-1) hash codes, as the module's hamming formulation implies.
    query = jnp.sign(jax.random.normal(kq, (1, BIT), dtype=jnp.float32))
    database = jnp.sign(jax.random.normal(kd, (BATCH, BIT), dtype=jnp.float32))

    loss = smooth_ap(query, database, POS_LEN, ANNEAL)
    loss = jax.block_until_ready(loss)

    ref = _reference_smooth_ap(np.asarray(query), np.asarray(database), POS_LEN, ANNEAL)
    assert np.allclose(float(loss), float(ref), rtol=1e-4, atol=1e-4), (
        float(loss),
        float(ref),
    )
    print("KERNEL_OK")
</pallas_src>

<mosaic_0001>
module attributes {stable_mosaic.version = 11 : i64} {
  func.func @_smooth_ap_kernel(%arg0: i32, %arg1: memref<1x32xf32, #tpu.memory_space<vmem>>, %arg2: memref<128x32xf32, #tpu.memory_space<vmem>>, %arg3: memref<1x128xf32, #tpu.memory_space<vmem>>, %arg4: memref<1x128xf32, #tpu.memory_space<vmem>>, %arg5: memref<1x128xf32, #tpu.memory_space<vmem>>) attributes {dimension_semantics = [#tpu.dimension_semantics<parallel>], iteration_bounds = array<i64: 1>, scalar_prefetch = 0 : i64, scratch_operands = 2 : i64, tpu.core_type = #tpu.core_type<tc>, window_params = [{pipeline_mode = #tpu.pipeline_mode<synchronous>, transform_indices = @transform_0, window_bounds = array<i64: 1, 32>}, {pipeline_mode = #tpu.pipeline_mode<synchronous>, transform_indices = @transform_1, window_bounds = array<i64: 128, 32>}, {transform_indices = @transform_2, window_bounds = array<i64: 1, 128>}]} {
    %c128_i32 = arith.constant 128 : i32
    %0 = arith.muli %arg0, %c128_i32 : i32
    %1 = tpu.assume_multiple %0, 128 : i32
    %c0 = arith.constant 0 : index
    %c0_0 = arith.constant 0 : index
    %2 = vector.load %arg1[%c0, %c0_0] : memref<1x32xf32, #tpu.memory_space<vmem>>, vector<1x32xf32>
    %3 = arith.index_cast %1 : i32 to index
    %c0_1 = arith.constant 0 : index
    %4 = vector.load %arg2[%3, %c0_1] : memref<128x32xf32, #tpu.memory_space<vmem>>, vector<128x32xf32>
    %cst = arith.constant dense<0.000000e+00> : vector<1x128xf32>
    %5 = tpu.matmul %2, %4, %cst {dimension_numbers = #tpu.dot_dimension_numbers<[1], [1], [0], [0], [0, 0, 1, 0], [], []>} : vector<1x32xf32>, vector<128x32xf32>, vector<1x128xf32> -> vector<1x128xf32>
    %cst_2 = arith.constant 2.500000e+00 : f32
    %6 = vector.broadcast %cst_2 : f32 to vector<1x128xf32>
    %7 = arith.mulf %5, %6 : vector<1x128xf32>
    %cst_3 = arith.constant 0.000000e+00 : f32
    %8 = vector.broadcast %cst_3 : f32 to vector<1x128xf32>
    %c0_4 = arith.constant 0 : index
    %c0_5 = arith.constant 0 : index
    %9 = vector.load %arg4[%c0_4, %c0_5] : memref<1x128xf32, #tpu.memory_space<vmem>>, vector<1x128xf32>
    tpu.vector_store %arg4[%c0_4, %c0_5], %8 {strides = array<i32>} : memref<1x128xf32, #tpu.memory_space<vmem>>, vector<1x128xf32>,
    %cst_6 = arith.constant 0.000000e+00 : f32
    %10 = vector.broadcast %cst_6 : f32 to vector<1x128xf32>
    %c0_7 = arith.constant 0 : index
    %c0_8 = arith.constant 0 : index
    %11 = vector.load %arg5[%c0_7, %c0_8] : memref<1x128xf32, #tpu.memory_space<vmem>>, vector<1x128xf32>
    tpu.vector_store %arg5[%c0_7, %c0_8], %10 {strides = array<i32>} : memref<1x128xf32, #tpu.memory_space<vmem>>, vector<1x128xf32>,
    %c0_9 = arith.constant 0 : index
    %c0_10 = arith.constant 0 : index
    %12 = vector.load %arg2[%c0_9, %c0_10] : memref<128x32xf32, #tpu.memory_space<vmem>>, vector<128x32xf32>
    %cst_11 = arith.constant dense<0.000000e+00> : vector<128x1xf32>
    %13 = tpu.matmul %12, %2, %cst_11 {dimension_numbers = #tpu.dot_dimension_numbers<[1], [1], [0], [0], [0, 0, 1, 0], [], []>} : vector<128x32xf32>, vector<1x32xf32>, vector<128x1xf32> -> vector<128x1xf32>
    %cst_12 = arith.constant 2.500000e+00 : f32
    %14 = vector.broadcast %cst_12 : f32 to vector<128x1xf32>
    %15 = arith.mulf %13, %14 : vector<128x1xf32>
    %16 = vector.broadcast %15 : vector<128x1xf32> to vector<128x128xf32>
    %17 = vector.broadcast %7 : vector<1x128xf32> to vector<128x128xf32>
    %18 = arith.subf %16, %17 : vector<128x128xf32>
    %19 = math.tanh %18 : vector<128x128xf32>
    %20 = tpu.iota {dimensions = array<i32: 0>} : vector<128x1xi32>
    %c0_i32 = arith.constant 0 : i32
    %21 = vector.broadcast %c0_i32 : i32 to vector<128x1xi32>
    %22 = arith.addi %21, %20 : vector<128x1xi32>
    %c8_i32 = arith.constant 8 : i32
    %23 = vector.broadcast %c8_i32 : i32 to vector<128x1xi32>
    %24 = arith.cmpi slt, %22, %23 : vector<128x1xi32>
    %cst_13 = arith.constant 0.000000e+00 : f32
    %25 = vector.shape_cast %24 : vector<128x1xi1> to vector<128x1xi1>
    %26 = vector.broadcast %25 : vector<128x1xi1> to vector<128x128xi1>
    %27 = vector.broadcast %cst_13 : f32 to vector<128x128xf32>
    %28 = arith.select %26, %19, %27 : vector<128x128xi1>, vector<128x128xf32>
    %cst_14 = arith.constant dense<0.000000e+00> : vector<128xf32>
    %29 = vector.multi_reduction <add>, %28, %cst_14 [0] : vector<128x128xf32> to vector<128xf32>
    %30 = vector.shape_cast %29 : vector<128xf32> to vector<1x128xf32>
    %c0_15 = arith.constant 0 : index
    %c0_16 = arith.constant 0 : index
    %31 = vector.load %arg4[%c0_15, %c0_16] : memref<1x128xf32, #tpu.memory_space<vmem>>, vector<1x128xf32>
    %32 = arith.addf %31, %30 : vector<1x128xf32>
    %c0_17 = arith.constant 0 : index
    %c0_18 = arith.constant 0 : index
    %33 = vector.load %arg4[%c0_17, %c0_18] : memref<1x128xf32, #tpu.memory_space<vmem>>, vector<1x128xf32>
    tpu.vector_store %arg4[%c0_17, %c0_18], %32 {strides = array<i32>} : memref<1x128xf32, #tpu.memory_space<vmem>>, vector<1x128xf32>,
    %c4_i32 = arith.constant 4 : i32
    %34 = vector.broadcast %c4_i32 : i32 to vector<128x1xi32>
    %35 = arith.cmpi slt, %22, %34 : vector<128x1xi32>
    %cst_19 = arith.constant 0.000000e+00 : f32
    %36 = vector.shape_cast %35 : vector<128x1xi1> to vector<128x1xi1>
    %37 = vector.broadcast %36 : vector<128x1xi1> to vector<128x128xi1>
    %38 = vector.broadcast %cst_19 : f32 to vector<128x128xf32>
    %39 = arith.select %37, %19, %38 : vector<128x128xi1>, vector<128x128xf32>
    %cst_20 = arith.constant dense<0.000000e+00> : vector<128xf32>
    %40 = vector.multi_reduction <add>, %39, %cst_20 [0] : vector<128x128xf32> to vector<128xf32>
    %41 = vector.shape_cast %40 : vector<128xf32> to vector<1x128xf32>
    %c0_21 = arith.constant 0 : index
    %c0_22 = arith.constant 0 : index
    %42 = vector.load %arg5[%c0_21, %c0_22] : memref<1x128xf32, #tpu.memory_space<vmem>>, vector<1x128xf32>
    %43 = arith.addf %42, %41 : vector<1x128xf32>
    %c0_23 = arith.constant 0 : index
    %c0_24 = arith.constant 0 : index
    %44 = vector.load %arg5[%c0_23, %c0_24] : memref<1x128xf32, #tpu.memory_space<vmem>>, vector<1x128xf32>
    tpu.vector_store %arg5[%c0_23, %c0_24], %43 {strides = array<i32>} : memref<1x128xf32, #tpu.memory_space<vmem>>, vector<1x128xf32>,
    %c0_25 = arith.constant 0 : index
    %c0_26 = arith.constant 0 : index
    %45 = vector.load %arg4[%c0_25, %c0_26] : memref<1x128xf32, #tpu.memory_space<vmem>>, vector<1x128xf32>
    %cst_27 = arith.constant 5.000000e-01 : f32
    %46 = vector.broadcast %cst_27 : f32 to vector<1x128xf32>
    %47 = arith.mulf %46, %45 : vector<1x128xf32>
    %cst_28 = arith.constant 4.500000e+00 : f32
    %48 = vector.broadcast %cst_28 : f32 to vector<1x128xf32>
    %49 = arith.addf %47, %48 : vector<1x128xf32>
    %c0_29 = arith.constant 0 : index
    %c0_30 = arith.constant 0 : index
    %50 = vector.load %arg5[%c0_29, %c0_30] : memref<1x128xf32, #tpu.memory_space<vmem>>, vector<1x128xf32>
    %cst_31 = arith.constant 5.000000e-01 : f32
    %51 = vector.broadcast %cst_31 : f32 to vector<1x128xf32>
    %52 = arith.mulf %51, %50 : vector<1x128xf32>
    %cst_32 = arith.constant 2.500000e+00 : f32
    %53 = vector.broadcast %cst_32 : f32 to vector<1x128xf32>
    %54 = arith.addf %52, %53 : vector<1x128xf32>
    %55 = tpu.iota {dimensions = array<i32: 1>} : vector<1x128xi32>
    %56 = vector.broadcast %1 : i32 to vector<1x128xi32>
    %57 = arith.addi %56, %55 : vector<1x128xi32>
    %c4_i32_33 = arith.constant 4 : i32
    %58 = vector.broadcast %c4_i32_33 : i32 to vector<1x128xi32>
    %59 = arith.cmpi slt, %57, %58 : vector<1x128xi32>
    %60 = arith.divf %54, %49 : vector<1x128xf32>
    %cst_34 = arith.constant 0.000000e+00 : f32
    %61 = vector.broadcast %cst_34 : f32 to vector<1x128xf32>
    %62 = arith.select %59, %60, %61 : vector<1x128xi1>, vector<1x128xf32>
    %c0_35 = arith.constant 0 : index
    %c0_36 = arith.constant 0 : index
    %63 = vector.load %arg3[%c0_35, %c0_36] : memref<1x128xf32, #tpu.memory_space<vmem>>, vector<1x128xf32>
    tpu.vector_store %arg3[%c0_35, %c0_36], %62 {strides = array<i32>} : memref<1x128xf32, #tpu.memory_space<vmem>>, vector<1x128xf32>,
    return
  }
  func.func @transform_0(%arg0: i32) -> (i32, i32) {
    %c0_i32 = arith.constant 0 : i32
    %c0_i32_0 = arith.constant 0 : i32
    %c0_i32_1 = arith.constant 0 : i32
    return %c0_i32, %c0_i32_0 : i32, i32
  }
  func.func @transform_1(%arg0: i32) -> (i32, i32) {
    %c0_i32 = arith.constant 0 : i32
    %c0_i32_0 = arith.constant 0 : i32
    %c0_i32_1 = arith.constant 0 : i32
    return %c0_i32, %c0_i32_0 : i32, i32
  }
  func.func @transform_2(%arg0: i32) -> (i32, i32) {
    %c0_i32 = arith.constant 0 : i32
    %c0_i32_0 = arith.constant 0 : i32
    return %c0_i32, %arg0 : i32, i32
  }
}

</mosaic_0001>

<llo_original>
// kernel: tpu_custom_call.1
$region0: #{tpu_custom_call.1}
  #allocation0 [shape = 'u32[]', space=smem, size = 0x4, offset = 0x4, fixed_abs, tag = 'smem constant byte address 0x4 - core index']
  #allocation1 [shape = 'u32[144,128]{1,0:T(1,128)}', space=vmem, size = 0x12000, scoped, tag = 'internal scratch']
  #allocation2 [shape = 'f32[1,128]{1,0:T(1,128)}', space=vmem, size = 0x200, scoped, tag = 'scratch operand']
  #allocation3 [shape = 'f32[1,128]{1,0:T(1,128)}', space=vmem, size = 0x200, scoped, tag = 'scratch operand']
  %s0 = inlined_call_operand.vmem [shape: f32[1,32], index: 0, kind: input, shape index: {}]
  %s1 = inlined_call_operand.vmem [shape: f32[128,32], index: 1, kind: input, shape index: {}]
  %s2 = inlined_call_operand.hbm [shape: f32[1,128], index: 2, kind: output, shape index: {}]
  %s3 = sld [smem:[#allocation0]]
  $region18: #{tpu_custom_call.1} parent=0
    _
  %s5 = ssub.s32 1, %s3
  %s6 = scalar_select 0, %s5, %s3
  $region1: #{tpu_custom_call.1} parent=0
    #allocation4 [shape = 'u8[512]{0}', space=vmem, size = 0x400, scoped, tag = 'output window, operand 0, single buffered']
    #allocation5 [shape = 's32[1]{0}', space=sflag, size = 0x4, scoped, tag = 'scoped memory for tpu_custom_call.1']
    %7 = vsyncpa [#allocation5], 0
    // Predicated region
    $region2: #{tpu_custom_call.1} parent=1 // pred_check
      _
    $region3: #{tpu_custom_call.1} parent=1 // pred_check_branch
      %9 = sbr.rel (0) target = $region5
    $region4: #{tpu_custom_call.1} parent=1 // pred_region
      _
    $region5: #{tpu_custom_call.1} parent=1 // pred_fallthru
      _
    // Predicated region
    $region6: #{tpu_custom_call.1} parent=1 // pred_check
      _
    $region7: #{tpu_custom_call.1} parent=1 // pred_check_branch
      %11 = sbr.rel (0) target = $region9
    $region8: #{tpu_custom_call.1} parent=1 // pred_region
      _
    $region9: #{tpu_custom_call.1} parent=1 // pred_fallthru
      _
    %s12 = smul.u32 0, 128
    %v13 = vld [vmem:[%s0] sm:$0x1]
    %s14 = scalar_lea.vmem %s1, %s12
    %v15 = vld [vmem:[%s14] sm:$0xff]
    %v16 = vld [vmem:[%s14 + $0x8] sm:$0xff]
    %v17 = vld [vmem:[%s14 + $0x10] sm:$0xff]
    %v18 = vld [vmem:[%s14 + $0x18] sm:$0xff]
    %v19 = vld [vmem:[%s14 + $0x20] sm:$0xff]
    %v20 = vld [vmem:[%s14 + $0x28] sm:$0xff]
    %v21 = vld [vmem:[%s14 + $0x30] sm:$0xff]
    %v22 = vld [vmem:[%s14 + $0x38] sm:$0xff]
    %v23 = vld [vmem:[%s14 + $0x40] sm:$0xff]
    %v24 = vld [vmem:[%s14 + $0x48] sm:$0xff]
    %v25 = vld [vmem:[%s14 + $0x50] sm:$0xff]
    %v26 = vld [vmem:[%s14 + $0x58] sm:$0xff]
    %v27 = vld [vmem:[%s14 + $0x60] sm:$0xff]
    %v28 = vld [vmem:[%s14 + $0x68] sm:$0xff]
    %v29 = vld [vmem:[%s14 + $0x70] sm:$0xff]
    %v30 = vld [vmem:[%s14 + $0x78] sm:$0xff]
    %vm31 = vcmask 261120
    %v33 = vsel %vm31, %v13, 0
    %v36 = vsel %vm31, %v15, 0
    %v39 = vsel %vm31, %v16, 0
    %v42 = vsel %vm31, %v17, 0
    %v45 = vsel %vm31, %v18, 0
    %v48 = vsel %vm31, %v19, 0
    %v51 = vsel %vm31, %v20, 0
    %v54 = vsel %vm31, %v21, 0
    %v57 = vsel %vm31, %v22, 0
    %v60 = vsel %vm31, %v23, 0
    %v63 = vsel %vm31, %v24, 0
    %v66 = vsel %vm31, %v25, 0
    %v69 = vsel %vm31, %v26, 0
    %v72 = vsel %vm31, %v27, 0
    %v75 = vsel %vm31, %v28, 0
    %v78 = vsel %vm31, %v29, 0
    %v81 = vsel %vm31, %v30, 0
    %83 = vmatprep.subr.mxu0 0.0
    %84 = vmatpush1.xpose.msra.mxu0 %v36
    %85 = vmatprep.subr.mxu0 0.0
    %86 = vmatpush1.xpose.msra.mxu0 %v39
    %87 = vmatprep.subr.mxu0 0.0
    %88 = vmatpush1.xpose.msra.mxu0 %v42
    %89 = vmatprep.subr.mxu0 0.0
    %90 = vmatpush1.xpose.msra.mxu0 %v45
    %91 = vmatprep.subr.mxu0 0.0
    %92 = vmatpush1.xpose.msra.mxu0 %v48
    %93 = vmatprep.subr.mxu0 0.0
    %94 = vmatpush1.xpose.msra.mxu0 %v51
    %95 = vmatprep.subr.mxu0 0.0
    %96 = vmatpush1.xpose.msra.mxu0 %v54
    %97 = vmatprep.subr.mxu0 0.0
    %98 = vmatpush1.xpose.msra.mxu0 %v57
    %99 = vmatprep.subr.mxu0 0.0
    %100 = vmatpush1.xpose.msra.mxu0 %v60
    %101 = vmatprep.subr.mxu0 0.0
    %102 = vmatpush1.xpose.msra.mxu0 %v63
    %103 = vmatprep.subr.mxu0 0.0
    %104 = vmatpush1.xpose.msra.mxu0 %v66
    %105 = vmatprep.subr.mxu0 0.0
    %106 = vmatpush1.xpose.msra.mxu0 %v69
    %107 = vmatprep.subr.mxu0 0.0
    %108 = vmatpush1.xpose.msra.mxu0 %v72
    %109 = vmatprep.subr.mxu0 0.0
    %110 = vmatpush1.xpose.msra.mxu0 %v75
    %111 = vmatprep.subr.mxu0 0.0
    %112 = vmatpush1.xpose.msra.mxu0 %v78
    %113 = vmatprep.subr.mxu0 0.0
    %114 = vmatpush1.xpose.msra.mxu0 %v81
    %115 = vmatprep.subr.mxu0 0.0
    %116 = vmatpush1.xpose.msra.mxu0 0.0
    %117 = vmatprep.subr.mxu0 0.0
    %118 = vmatpush1.xpose.msra.mxu0 0.0
    %119 = vmatprep.subr.mxu0 0.0
    %120 = vmatpush1.xpose.msra.mxu0 0.0
    %121 = vmatprep.subr.mxu0 0.0
    %122 = vmatpush1.xpose.msra.mxu0 0.0
    %123 = vmatprep.subr.mxu0 0.0
    %124 = vmatpush1.xpose.msra.mxu0 0.0
    %125 = vmatprep.subr.mxu0 0.0
    %126 = vmatpush1.xpose.msra.mxu0 0.0
    %127 = vmatprep.subr.mxu0 0.0
    %128 = vmatpush1.xpose.msra.mxu0 0.0
    %129 = vmatprep.subr.mxu0 0.0
    %130 = vmatpush1.xpose.msra.mxu0 0.0
    %131 = vmatprep.subr.mxu0 0.0
    %132 = vmatpush1.xpose.msra.mxu0 0.0
    %133 = vmatprep.subr.mxu0 0.0
    %134 = vmatpush1.xpose.msra.mxu0 0.0
    %135 = vmatprep.subr.mxu0 0.0
    %136 = vmatpush1.xpose.msra.mxu0 0.0
    %137 = vmatprep.subr.mxu0 0.0
    %138 = vmatpush1.xpose.msra.mxu0 0.0
    %139 = vmatprep.subr.mxu0 0.0
    %140 = vmatpush1.xpose.msra.mxu0 0.0
    %141 = vmatprep.subr.mxu0 0.0
    %142 = vmatpush1.xpose.msra.mxu0 0.0
    %143 = vmatprep.subr.mxu0 0.0
    %144 = vmatpush1.xpose.msra.mxu0 0.0
    %145 = vmatprep.subr.mxu0 0.0
    %146 = vmatpush1.xpose.msra.mxu0 0.0
    %147 = vmatprep.mubr.f32.mxu0 0.0
    %148 = vmatmul.mubr.f32.gmra.mrb[0].mxu0 %v33
    %v149 = vpop.f32.mrb[0].mxu0
    %v150 = vadd.f32 0.0, %v149
    %v151 = vpop.f32.mrb[0].mxu0
    %152 = vdwg.mxu0
    %v153 = vmul.f32 %v150, 2.5
    %154 = vst [vmem:[#allocation2] sm:$0x1] 0.0
    %155 = vst [vmem:[#allocation3] sm:$0x1] 0.0
    %v156 = vld [vmem:[%s1] sm:$0xff]
    %v157 = vld [vmem:[%s1 + $0x8] sm:$0xff]
    %v158 = vld [vmem:[%s1 + $0x10] sm:$0xff]
    %v159 = vld [vmem:[%s1 + $0x18] sm:$0xff]
    %v160 = vld [vmem:[%s1 + $0x20] sm:$0xff]
    %v161 = vld [vmem:[%s1 + $0x28] sm:$0xff]
    %v162 = vld [vmem:[%s1 + $0x30] sm:$0xff]
    %v163 = vld [vmem:[%s1 + $0x38] sm:$0xff]
    %v164 = vld [vmem:[%s1 + $0x40] sm:$0xff]
    %v165 = vld [vmem:[%s1 + $0x48] sm:$0xff]
    %v166 = vld [vmem:[%s1 + $0x50] sm:$0xff]
    %v167 = vld [vmem:[%s1 + $0x58] sm:$0xff]
    %v168 = vld [vmem:[%s1 + $0x60] sm:$0xff]
    %v169 = vld [vmem:[%s1 + $0x68] sm:$0xff]
    %v170 = vld [vmem:[%s1 + $0x70] sm:$0xff]
    %v171 = vld [vmem:[%s1 + $0x78] sm:$0xff]
    %v172 = vlaneseq
    %v173 = vshrl.u32 %v172, 7
    %v174 = vsub.s32 0, %v173
    %v175 = vrot.slane %v13, %v174
    %v177 = vmul.f32 %v156, %v175
    %v178 = vmul.f32 %v157, %v175
    %v179 = vmul.f32 %v158, %v175
    %v180 = vmul.f32 %v159, %v175
    %v181 = vmul.f32 %v160, %v175
    %v182 = vmul.f32 %v161, %v175
    %v183 = vmul.f32 %v162, %v175
    %v184 = vmul.f32 %v163, %v175
    %v185 = vmul.f32 %v164, %v175
    %v186 = vmul.f32 %v165, %v175
    %v187 = vmul.f32 %v166, %v175
    %v188 = vmul.f32 %v167, %v175
    %v189 = vmul.f32 %v168, %v175
    %v190 = vmul.f32 %v169, %v175
    %v191 = vmul.f32 %v170, %v175
    %v192 = vmul.f32 %v171, %v175
    %v193 = vsel %vm31, %v177, 0.0
    %194 = vadd.xlane.f32.xlu0 %v193
    %v195 = vpop.xlane.xlu0 %194
    %v196 = vsel %vm31, %v178, 0.0
    %197 = vadd.xlane.f32.xlu0 %v196
    %v198 = vpop.xlane.xlu0 %197
    %v199 = vsel %vm31, %v179, 0.0
    %200 = vadd.xlane.f32.xlu0 %v199
    %v201 = vpop.xlane.xlu0 %200
    %v202 = vsel %vm31, %v180, 0.0
    %203 = vadd.xlane.f32.xlu0 %v202
    %v204 = vpop.xlane.xlu0 %203
    %v205 = vsel %vm31, %v181, 0.0
    %206 = vadd.xlane.f32.xlu0 %v205
    %v207 = vpop.xlane.xlu0 %206
    %v208 = vsel %vm31, %v182, 0.0
    %209 = vadd.xlane.f32.xlu0 %v208
    %v210 = vpop.xlane.xlu0 %209
    %v211 = vsel %vm31, %v183, 0.0
    %212 = vadd.xlane.f32.xlu0 %v211
    %v213 = vpop.xlane.xlu0 %212
    %v214 = vsel %vm31, %v184, 0.0
    %215 = vadd.xlane.f32.xlu0 %v214
    %v216 = vpop.xlane.xlu0 %215
    %v217 = vsel %vm31, %v185, 0.0
    %218 = vadd.xlane.f32.xlu0 %v217
    %v219 = vpop.xlane.xlu0 %218
    %v220 = vsel %vm31, %v186, 0.0
    %221 = vadd.xlane.f32.xlu0 %v220
    %v222 = vpop.xlane.xlu0 %221
    %v223 = vsel %vm31, %v187, 0.0
    %224 = vadd.xlane.f32.xlu0 %v223
    %v225 = vpop.xlane.xlu0 %224
    %v226 = vsel %vm31, %v188, 0.0
    %227 = vadd.xlane.f32.xlu0 %v226
    %v228 = vpop.xlane.xlu0 %227
    %v229 = vsel %vm31, %v189, 0.0
    %230 = vadd.xlane.f32.xlu0 %v229
    %v231 = vpop.xlane.xlu0 %230
    %v232 = vsel %vm31, %v190, 0.0
    %233 = vadd.xlane.f32.xlu0 %v232
    %v234 = vpop.xlane.xlu0 %233
    %v235 = vsel %vm31, %v191, 0.0
    %236 = vadd.xlane.f32.xlu0 %v235
    %v237 = vpop.xlane.xlu0 %236
    %v238 = vsel %vm31, %v192, 0.0
    %239 = vadd.xlane.f32.xlu0 %v238
    %v240 = vpop.xlane.xlu0 %239
    %v241 = vmul.f32 %v195, 2.5
    %v242 = vmul.f32 %v198, 2.5
    %v243 = vmul.f32 %v201, 2.5
    %v244 = vmul.f32 %v204, 2.5
    %v245 = vmul.f32 %v207, 2.5
    %v246 = vmul.f32 %v210, 2.5
    %v247 = vmul.f32 %v213, 2.5
    %v248 = vmul.f32 %v216, 2.5
    %v249 = vmul.f32 %v219, 2.5
    %v250 = vmul.f32 %v222, 2.5
    %v251 = vmul.f32 %v225, 2.5
    %v252 = vmul.f32 %v228, 2.5
    %v253 = vmul.f32 %v231, 2.5
    %v254 = vmul.f32 %v234, 2.5
    %v255 = vmul.f32 %v237, 2.5
    %v256 = vmul.f32 %v240, 2.5
    %v257 = vlaneseq
    %v258 = vshrl.u32 %v257, 7
    %v259 = vsub.s32 0, %v258
    %v260 = vrot.slane %v153, %v259
    %v261 = vsub.f32 %v241, %v260
    %v262 = vsub.f32 %v242, %v260
    %v263 = vsub.f32 %v243, %v260
    %v264 = vsub.f32 %v244, %v260
    %v265 = vsub.f32 %v245, %v260
    %v266 = vsub.f32 %v246, %v260
    %v267 = vsub.f32 %v247, %v260
    %v268 = vsub.f32 %v248, %v260
    %v269 = vsub.f32 %v249, %v260
    %v270 = vsub.f32 %v250, %v260
    %v271 = vsub.f32 %v251, %v260
    %v272 = vsub.f32 %v252, %v260
    %v273 = vsub.f32 %v253, %v260
    %v274 = vsub.f32 %v254, %v260
    %v275 = vsub.f32 %v255, %v260
    %v276 = vsub.f32 %v256, %v260
    %v277 = vtanh.pop %v261
    %v278 = vtanh.pop %v262
    %v279 = vtanh.pop %v263
    %v280 = vtanh.pop %v264
    %v281 = vtanh.pop %v265
    %v282 = vtanh.pop %v266
    %v283 = vtanh.pop %v267
    %v284 = vtanh.pop %v268
    %v285 = vtanh.pop %v269
    %v286 = vtanh.pop %v270
    %v287 = vtanh.pop %v271
    %v288 = vtanh.pop %v272
    %v289 = vtanh.pop %v273
    %v290 = vtanh.pop %v274
    %v291 = vtanh.pop %v275
    %v292 = vtanh.pop %v276
    %v293 = vlaneseq
    %v294 = vshrl.u32 %v293, 7
    %v295 = vadd.s32 %v294, 8
    %v296 = vadd.s32 %v294, 16
    %v297 = vadd.s32 %v294, 24
    %v298 = vadd.s32 %v294, 32
    %v299 = vadd.s32 %v294, 40
    %v300 = vadd.s32 %v294, 48
    %v301 = vadd.s32 %v294, 56
    %v302 = vadd.s32 %v294, 64
    %v303 = vadd.s32 %v294, 72
    %v304 = vadd.s32 %v294, 80
    %v305 = vadd.s32 %v294, 88
    %v306 = vadd.s32 %v294, 96
    %v307 = vadd.s32 %v294, 104
    %v308 = vadd.s32 %v294, 112
    %v309 = vadd.s32 %v294, 120
    %vm310 = vcmp.lt.s32.totalorder %v294, 8
    %vm311 = vcmp.lt.s32.totalorder %v295, 8
    %vm312 = vcmp.lt.s32.totalorder %v296, 8
    %vm313 = vcmp.lt.s32.totalorder %v297, 8
    %vm314 = vcmp.lt.s32.totalorder %v298, 8
    %vm315 = vcmp.lt.s32.totalorder %v299, 8
    %vm316 = vcmp.lt.s32.totalorder %v300, 8
    %vm317 = vcmp.lt.s32.totalorder %v301, 8
    %vm318 = vcmp.lt.s32.totalorder %v302, 8
    %vm319 = vcmp.lt.s32.totalorder %v303, 8
    %vm320 = vcmp.lt.s32.totalorder %v304, 8
    %vm321 = vcmp.lt.s32.totalorder %v305, 8
    %vm322 = vcmp.lt.s32.totalorder %v306, 8
    %vm323 = vcmp.lt.s32.totalorder %v307, 8
    %vm324 = vcmp.lt.s32.totalorder %v308, 8
    %vm325 = vcmp.lt.s32.totalorder %v309, 8
    %v326 = vsel %vm310, 1, 0
    %v327 = vsel %vm311, 1, 0
    %v328 = vsel %vm312, 1, 0
    %v329 = vsel %vm313, 1, 0
    %v330 = vsel %vm314, 1, 0
    %v331 = vsel %vm315, 1, 0
    %v332 = vsel %vm316, 1, 0
    %v333 = vsel %vm317, 1, 0
    %v334 = vsel %vm318, 1, 0
    %v335 = vsel %vm319, 1, 0
    %v336 = vsel %vm320, 1, 0
    %v337 = vsel %vm321, 1, 0
    %v338 = vsel %vm322, 1, 0
    %v339 = vsel %vm323, 1, 0
    %v340 = vsel %vm324, 1, 0
    %v341 = vsel %vm325, 1, 0
    %vm342 = vcmp.eq.s32.totalorder %v326, 1
    %vm343 = vcmp.eq.s32.totalorder %v327, 1
    %vm344 = vcmp.eq.s32.totalorder %v328, 1
    %vm345 = vcmp.eq.s32.totalorder %v329, 1
    %vm346 = vcmp.eq.s32.totalorder %v330, 1
    %vm347 = vcmp.eq.s32.totalorder %v331, 1
    %vm348 = vcmp.eq.s32.totalorder %v332, 1
    %vm349 = vcmp.eq.s32.totalorder %v333, 1
    %vm350 = vcmp.eq.s32.totalorder %v334, 1
    %vm351 = vcmp.eq.s32.totalorder %v335, 1
    %vm352 = vcmp.eq.s32.totalorder %v336, 1
    %vm353 = vcmp.eq.s32.totalorder %v337, 1
    %vm354 = vcmp.eq.s32.totalorder %v338, 1
    %vm355 = vcmp.eq.s32.totalorder %v339, 1
    %vm356 = vcmp.eq.s32.totalorder %v340, 1
    %vm357 = vcmp.eq.s32.totalorder %v341, 1
    %v358 = vsel %vm342, %v277, 0.0
    %v359 = vsel %vm343, %v278, 0.0
    %v360 = vsel %vm344, %v279, 0.0
    %v361 = vsel %vm345, %v280, 0.0
    %v362 = vsel %vm346, %v281, 0.0
    %v363 = vsel %vm347, %v282, 0.0
    %v364 = vsel %vm348, %v283, 0.0
    %v365 = vsel %vm349, %v284, 0.0
    %v366 = vsel %vm350, %v285, 0.0
    %v367 = vsel %vm351, %v286, 0.0
    %v368 = vsel %vm352, %v287, 0.0
    %v369 = vsel %vm353, %v288, 0.0
    %v370 = vsel %vm354, %v289, 0.0
    %v371 = vsel %vm355, %v290, 0.0
    %v372 = vsel %vm356, %v291, 0.0
    %v373 = vsel %vm357, %v292, 0.0
    %v374 = vadd.f32 %v358, %v359
    %v375 = vadd.f32 %v374, %v360
    %v376 = vadd.f32 %v375, %v361
    %v377 = vadd.f32 %v376, %v362
    %v378 = vadd.f32 %v377, %v363
    %v379 = vadd.f32 %v378, %v364
    %v380 = vadd.f32 %v379, %v365
    %v381 = vadd.f32 %v380, %v366
    %v382 = vadd.f32 %v381, %v367
    %v383 = vadd.f32 %v382, %v368
    %v384 = vadd.f32 %v383, %v369
    %v385 = vadd.f32 %v384, %v370
    %v386 = vadd.f32 %v385, %v371
    %v387 = vadd.f32 %v386, %v372
    %v388 = vadd.f32 %v387, %v373
    %v389 = vrot.slane %v388, 4
    %v390 = vadd.f32 %v388, %v389
    %v391 = vrot.slane %v390, 2
    %v392 = vadd.f32 %v390, %v391
    %v393 = vrot.slane %v392, 1
    %v394 = vadd.f32 %v392, %v393
    %v395 = vld [vmem:[#allocation2] sm:$0x1]
    %v396 = vadd.f32 %v395, %v394
    %397 = vst [vmem:[#allocation2] sm:$0x1] %v396
    %vm398 = vcmp.lt.s32.totalorder %v294, 4
    %vm399 = vcmp.lt.s32.totalorder %v295, 4
    %vm400 = vcmp.lt.s32.totalorder %v296, 4
    %vm401 = vcmp.lt.s32.totalorder %v297, 4
    %vm402 = vcmp.lt.s32.totalorder %v298, 4
    %vm403 = vcmp.lt.s32.totalorder %v299, 4
    %vm404 = vcmp.lt.s32.totalorder %v300, 4
    %vm405 = vcmp.lt.s32.totalorder %v301, 4
    %vm406 = vcmp.lt.s32.totalorder %v302, 4
    %vm407 = vcmp.lt.s32.totalorder %v303, 4
    %vm408 = vcmp.lt.s32.totalorder %v304, 4
    %vm409 = vcmp.lt.s32.totalorder %v305, 4
    %vm410 = vcmp.lt.s32.totalorder %v306, 4
    %vm411 = vcmp.lt.s32.totalorder %v307, 4
    %vm412 = vcmp.lt.s32.totalorder %v308, 4
    %vm413 = vcmp.lt.s32.totalorder %v309, 4
    %v414 = vsel %vm398, 1, 0
    %v415 = vsel %vm399, 1, 0
    %v416 = vsel %vm400, 1, 0
    %v417 = vsel %vm401, 1, 0
    %v418 = vsel %vm402, 1, 0
    %v419 = vsel %vm403, 1, 0
    %v420 = vsel %vm404, 1, 0
    %v421 = vsel %vm405, 1, 0
    %v422 = vsel %vm406, 1, 0
    %v423 = vsel %vm407, 1, 0
    %v424 = vsel %vm408, 1, 0
    %v425 = vsel %vm409, 1, 0
    %v426 = vsel %vm410, 1, 0
    %v427 = vsel %vm411, 1, 0
    %v428 = vsel %vm412, 1, 0
    %v429 = vsel %vm413, 1, 0
    %vm430 = vcmp.eq.s32.totalorder %v414, 1
    %vm431 = vcmp.eq.s32.totalorder %v415, 1
    %vm432 = vcmp.eq.s32.totalorder %v416, 1
    %vm433 = vcmp.eq.s32.totalorder %v417, 1
    %vm434 = vcmp.eq.s32.totalorder %v418, 1
    %vm435 = vcmp.eq.s32.totalorder %v419, 1
    %vm436 = vcmp.eq.s32.totalorder %v420, 1
    %vm437 = vcmp.eq.s32.totalorder %v421, 1
    %vm438 = vcmp.eq.s32.totalorder %v422, 1
    %vm439 = vcmp.eq.s32.totalorder %v423, 1
    %vm440 = vcmp.eq.s32.totalorder %v424, 1
    %vm441 = vcmp.eq.s32.totalorder %v425, 1
    %vm442 = vcmp.eq.s32.totalorder %v426, 1
    %vm443 = vcmp.eq.s32.totalorder %v427, 1
    %vm444 = vcmp.eq.s32.totalorder %v428, 1
    %vm445 = vcmp.eq.s32.totalorder %v429, 1
    %v446 = vsel %vm430, %v277, 0.0
    %v447 = vsel %vm431, %v278, 0.0
    %v448 = vsel %vm432, %v279, 0.0
    %v449 = vsel %vm433, %v280, 0.0
    %v450 = vsel %vm434, %v281, 0.0
    %v451 = vsel %vm435, %v282, 0.0
    %v452 = vsel %vm436, %v283, 0.0
    %v453 = vsel %vm437, %v284, 0.0
    %v454 = vsel %vm438, %v285, 0.0
    %v455 = vsel %vm439, %v286, 0.0
    %v456 = vsel %vm440, %v287, 0.0
    %v457 = vsel %vm441, %v288, 0.0
    %v458 = vsel %vm442, %v289, 0.0
    %v459 = vsel %vm443, %v290, 0.0
    %v460 = vsel %vm444, %v291, 0.0
    %v461 = vsel %vm445, %v292, 0.0
    %v462 = vadd.f32 %v446, %v447
    %v463 = vadd.f32 %v462, %v448
    %v464 = vadd.f32 %v463, %v449
    %v465 = vadd.f32 %v464, %v450
    %v466 = vadd.f32 %v465, %v451
    %v467 = vadd.f32 %v466, %v452
    %v468 = vadd.f32 %v467, %v453
    %v469 = vadd.f32 %v468, %v454
    %v470 = vadd.f32 %v469, %v455
    %v471 = vadd.f32 %v470, %v456
    %v472 = vadd.f32 %v471, %v457
    %v473 = vadd.f32 %v472, %v458
    %v474 = vadd.f32 %v473, %v459
    %v475 = vadd.f32 %v474, %v460
    %v476 = vadd.f32 %v475, %v461
    %v477 = vrot.slane %v476, 4
    %v478 = vadd.f32 %v476, %v477
    %v479 = vrot.slane %v478, 2
    %v480 = vadd.f32 %v478, %v479
    %v481 = vrot.slane %v480, 1
    %v482 = vadd.f32 %v480, %v481
    %v483 = vld [vmem:[#allocation3] sm:$0x1]
    %v484 = vadd.f32 %v483, %v482
    %485 = vst [vmem:[#allocation3] sm:$0x1] %v484
    %v486 = vld [vmem:[#allocation2] sm:$0x1]
    %v487 = vmul.f32 %v486, 0.5
    %v488 = vadd.f32 %v487, 4.5
    %v489 = vld [vmem:[#allocation3] sm:$0x1]
    %v490 = vmul.f32 %v489, 0.5
    %v491 = vadd.f32 %v490, 2.5
    %v492 = vlaneseq
    %v493 = vand.u32 %v492, 127
    %v494 = vstv %s12
    %v495 = vadd.s32 %v494, %v493
    %vm496 = vcmp.lt.s32.totalorder %v495, 4
    %v497 = vrcp.pop %v488
    %v498 = vmul.f32 %v491, %v497
    %v499 = vsel %vm496, %v498, 0.0
    %500 = vst [vmem:[#allocation4] sm:$0x1] %v499
    // Predicated region
    $region10: #{tpu_custom_call.1} parent=1 // pred_check
      _
    $region11: #{tpu_custom_call.1} parent=1 // pred_check_branch
      %502 = sbr.rel (0) target = $region13
    $region12: #{tpu_custom_call.1} parent=1 // pred_region
      %s504 = ssub.s32 16, 16
      %505 = vsyncadd [#allocation5], %s504
      %s507 = sshll.u32 [#allocation4], 4
      %s508 = int_to_ptr.vmem [resolvable:$true] %s507
      %510 = dma.vmem_to_hbm [thread:$0]  %s508, 16, %s2, [#allocation5]
    $region13: #{tpu_custom_call.1} parent=1 // pred_fallthru
      _
    // Predicated region
    $region14: #{tpu_custom_call.1} parent=1 // pred_check
      _
    $region15: #{tpu_custom_call.1} parent=1 // pred_check_branch
      %512 = sbr.rel (0) target = $region17
    $region16: #{tpu_custom_call.1} parent=1 // pred_region
      %513 = dma.done [#allocation5], 16
    $region17: #{tpu_custom_call.1} parent=1 // pred_fallthru
      _
    %514 = vsyncpa [#allocation5], 1

</llo_original>
